<compile_context>
chip_gen: v7x
topology: tpu7x:2x2x1
jax: 0.10.0
libtpu: 0.0.40
codegen_flags: <defaults>
</compile_context>

<pallas_src>
import jax
import jax.numpy as jnp
from jax.experimental import pallas as pl
from jax.experimental.pallas import tpu as pltpu

_LANE = 128
_SUBLANE = 8
_SMALL_FUSE_THRESHOLD = 64 * 1024  # elements: below this, let XLA fuse the +1


def _addone_kernel(x_ref, o_ref):
    # Single VPU elementwise add; no scratch, no pl.when, nothing else needed.
    o_ref[...] = x_ref[...] + jnp.asarray(1, dtype=o_ref.dtype)


def _vmem_budget_bytes():
    """Per-TC VMEM budget with headroom (generation-aware, conservative)."""
    cap = 64 * 1024 * 1024  # v7x has the smallest per-TC VMEM (64 MiB)
    try:
        info = pltpu.get_tpu_info()
        cap = int(getattr(info, "vmem_capacity_bytes", cap)) or cap
    except Exception:
        pass
    return (3 * cap) // 4  # leave headroom for compiler-internal scratch


def addone_forward(x, *, force_pallas=False, donate_input=False,
                   tile_rows=1024, single_block_max_bytes=None):
    """y = x + 1 (Pallas TPU path for non-tiny inputs)."""
    if x.size == 0:
        return x
    if (not force_pallas) and x.size < _SMALL_FUSE_THRESHOLD:
        # Fixed-overhead bound at this size: fuse into the XLA graph instead.
        return x + jnp.asarray(1, dtype=x.dtype)

    orig_shape = x.shape
    n = x.size
    itemsize = jnp.dtype(x.dtype).itemsize

    # ---- present a lane-dense 2-D view: last dim = 128, pad tail if needed.
    pad = (-n) % _LANE
    flat = x.reshape(-1)
    if pad:
        flat = jnp.pad(flat, (0, pad))
    rows = (n + pad) // _LANE
    x2 = flat.reshape(rows, _LANE)

    nbytes = x2.size * itemsize
    budget = _vmem_budget_bytes() if single_block_max_bytes is None \
        else int(single_block_max_bytes)

    common = dict(out_shape=jax.ShapeDtypeStruct(x2.shape, x.dtype))
    if donate_input:
        # Output reuses the input HBM buffer when the caller no longer needs x.
        common["input_output_aliases"] = {0: 0}

    if 2 * nbytes <= budget:
        # ---- single full-array VMEM block: zero per-step pipeline overhead.
        out = pl.pallas_call(
            _addone_kernel,
            in_specs=[pl.BlockSpec(memory_space=pltpu.MemorySpace.VMEM)],
            out_specs=pl.BlockSpec(memory_space=pltpu.MemorySpace.VMEM),
            compiler_params=pltpu.CompilerParams(
                vmem_limit_bytes=min(_vmem_budget_bytes(),
                                     4 * nbytes + (1 << 20))),
            **common,
        )(x2)
    else:
        # ---- tiled streaming path (mem-bound; default double-buffering).
        tr = max(_SUBLANE, min(int(tile_rows), rows))
        tr -= tr % _SUBLANE
        out = pl.pallas_call(
            _addone_kernel,
            grid=(pl.cdiv(rows, tr),),
            in_specs=[pl.BlockSpec((tr, _LANE), lambda i: (i, 0))],
            out_specs=pl.BlockSpec((tr, _LANE), lambda i: (i, 0)),
            compiler_params=pltpu.CompilerParams(
                dimension_semantics=("parallel",)),  # v7x: both TCs stream
            **common,
        )(x2)

    out = out.reshape(-1)
    if pad:
        out = out[:n]
    return out.reshape(orig_shape)


def addone_inverse(x):
    """inverse(x) = (x - 1, logdet=0) — plain JAX (fused by XLA)."""
    return x - jnp.asarray(1, dtype=x.dtype), jnp.zeros((), dtype=x.dtype)


def make_normal_batch(key, size, batch_size, dtype=jnp.float32):
    """Samples from N(0, I) of dim `size` — mirrors the torch helper."""
    return jax.random.normal(key, (batch_size, size), dtype=dtype)


if __name__ == "__main__":
    # hparams consistent with the module: channels=32, batch_size=8
    hparams = {"channels": 32, "batch_size": 8}

    key = jax.random.PRNGKey(0)
    x = make_normal_batch(key, hparams["channels"], hparams["batch_size"])

    # 1) spec-size run, forcing the Pallas single-block path.
    y = addone_forward(x, force_pallas=True)
    y = jax.block_until_ready(y)
    assert y.shape == (hparams["batch_size"], hparams["channels"])
    assert jnp.allclose(y, x + 1, atol=1e-6, rtol=1e-6)

    # 2) exercise the tiled-grid path (budget override forces tiling) on a
    #    slightly larger, non-multiple-of-128 flat size to hit the pad branch.
    key2 = jax.random.PRNGKey(1)
    xl = jax.random.normal(key2, (300, 333), dtype=jnp.float32)
    yl = addone_forward(xl, force_pallas=True, single_block_max_bytes=0,
                        tile_rows=256)
    yl = jax.block_until_ready(yl)
    assert yl.shape == xl.shape
    assert jnp.allclose(yl, xl + 1, atol=1e-6, rtol=1e-6)

    # 3) inverse round-trip (plain JAX path, by design).
    inv, logdet = addone_inverse(y)
    assert jnp.allclose(inv, x, atol=1e-6, rtol=1e-6)
    assert logdet == 0

    print("KERNEL_OK")
</pallas_src>

<mosaic_0001>
module attributes {stable_mosaic.version = 11 : i64} {
  func.func @_addone_kernel(%arg0: memref<2x128xf32, #tpu.memory_space<vmem>>, %arg1: memref<2x128xf32, #tpu.memory_space<vmem>>) attributes {dimension_semantics = [], scalar_prefetch = 0 : i64, scratch_operands = 0 : i64, tpu.core_type = #tpu.core_type<tc>} {
    %c0 = arith.constant 0 : index
    %c0_0 = arith.constant 0 : index
    %0 = vector.load %arg0[%c0, %c0_0] : memref<2x128xf32, #tpu.memory_space<vmem>>, vector<2x128xf32>
    %cst = arith.constant 1.000000e+00 : f32
    %1 = vector.broadcast %cst : f32 to vector<2x128xf32>
    %2 = arith.addf %0, %1 : vector<2x128xf32>
    %c0_1 = arith.constant 0 : index
    %c0_2 = arith.constant 0 : index
    %3 = vector.load %arg1[%c0_1, %c0_2] : memref<2x128xf32, #tpu.memory_space<vmem>>, vector<2x128xf32>
    tpu.vector_store %arg1[%c0_1, %c0_2], %2 {strides = array<i32>} : memref<2x128xf32, #tpu.memory_space<vmem>>, vector<2x128xf32>,
    return
  }
}

</mosaic_0001>

<llo_original>
// kernel: tpu_custom_call.1
$region0: #{tpu_custom_call.1}
  #allocation0 [shape = 'u32[]', space=smem, size = 0x4, offset = 0x4, fixed_abs, tag = 'smem constant byte address 0x4 - core index']
  #allocation1 [shape = 'u32[144,128]{1,0:T(1,128)}', space=vmem, size = 0x12000, scoped, tag = 'internal scratch']
  %s0 = inlined_call_operand.hbm [shape: f32[2,128], index: 0, kind: input, shape index: {}]
  %s1 = inlined_call_operand.hbm [shape: f32[2,128], index: 1, kind: output, shape index: {}]
  %s2 = sld [smem:[#allocation0]]
  $region18: #{tpu_custom_call.1} parent=0
    _
  %s4 = ssub.s32 1, %s2
  %s5 = scalar_select 0, %s4, %s2
  $region1: #{tpu_custom_call.1} parent=0
    #allocation2 [shape = 'u8[1024]{0}', space=vmem, size = 0x400, scoped, tag = 'input window, operand 0, single buffered']
    #allocation3 [shape = 's32[1]{0}', space=sflag, size = 0x4, scoped, tag = 'scoped memory for tpu_custom_call.1']
    #allocation4 [shape = 's32[1]{0}', space=sflag, size = 0x4, scoped, tag = 'scoped memory for tpu_custom_call.1']
    #allocation5 [shape = 'u8[1024]{0}', space=vmem, size = 0x400, scoped, tag = 'output window, operand 0, single buffered']
    %6 = vsyncpa [#allocation3], 0
    %7 = vsyncpa [#allocation4], 0
    // Predicated region
    $region2: #{tpu_custom_call.1} parent=1 // pred_check
      _
    $region3: #{tpu_custom_call.1} parent=1 // pred_check_branch
      %9 = sbr.rel (0) target = $region5
    $region4: #{tpu_custom_call.1} parent=1 // pred_region
      %s11 = ssub.s32 32, 32
      %12 = vsyncadd [#allocation3], %s11
      %s14 = sshll.u32 [#allocation2], 4
      %s15 = int_to_ptr.vmem [resolvable:$true] %s14
      %17 = dma.hbm_to_vmem [thread:$0]  %s0, 32, %s15, [#allocation3]
    $region5: #{tpu_custom_call.1} parent=1 // pred_fallthru
      _
    // Predicated region
    $region6: #{tpu_custom_call.1} parent=1 // pred_check
      _
    $region7: #{tpu_custom_call.1} parent=1 // pred_check_branch
      %19 = sbr.rel (0) target = $region9
    $region8: #{tpu_custom_call.1} parent=1 // pred_region
      %20 = dma.done [#allocation3], 32
    $region9: #{tpu_custom_call.1} parent=1 // pred_fallthru
      _
    %v21 = vld [vmem:[#allocation2] sm:$0x3]
    %v22 = vadd.f32 %v21, 1.0
    %23 = vst [vmem:[#allocation5] sm:$0x3] %v22
    // Predicated region
    $region10: #{tpu_custom_call.1} parent=1 // pred_check
      _
    $region11: #{tpu_custom_call.1} parent=1 // pred_check_branch
      %25 = sbr.rel (0) target = $region13
    $region12: #{tpu_custom_call.1} parent=1 // pred_region
      %s27 = ssub.s32 32, 32
      %28 = vsyncadd [#allocation4], %s27
      %s30 = sshll.u32 [#allocation5], 4
      %s31 = int_to_ptr.vmem [resolvable:$true] %s30
      %33 = dma.vmem_to_hbm [thread:$0]  %s31, 32, %s1, [#allocation4]
    $region13: #{tpu_custom_call.1} parent=1 // pred_fallthru
      _
    // Predicated region
    $region14: #{tpu_custom_call.1} parent=1 // pred_check
      _
    $region15: #{tpu_custom_call.1} parent=1 // pred_check_branch
      %35 = sbr.rel (0) target = $region17
    $region16: #{tpu_custom_call.1} parent=1 // pred_region
      %36 = dma.done [#allocation4], 32
    $region17: #{tpu_custom_call.1} parent=1 // pred_fallthru
      _
    %37 = vsyncpa [#allocation3], 1
    %38 = vsyncpa [#allocation4], 1

</llo_original>
